<compile_context>
chip_gen: v7x
topology: tpu7x:2x2x1
jax: 0.10.0
libtpu: 0.0.40
codegen_flags: <defaults>
</compile_context>

<pallas_src>
import functools

import jax
import jax.numpy as jnp
from jax.experimental import pallas as pl
from jax.experimental.pallas import tpu as pltpu


def _round_up(a, b):
    return ((a + b - 1) // b) * b


# ---------------------------------------------------------------------------
# Kernel 1: streaming global sum pool (the HBM-bandwidth-bound part).
# ---------------------------------------------------------------------------
def _global_sum_pool_kernel(x_ref, o_ref, acc_ref, *, lane_tiles):
    """Grid = (hw_split ['parallel'], row tiles ['parallel'], hw tiles ['arbitrary']).

    x_ref:   (r_tile, hw_tile)  input tile, native dtype (rows = flattened N*C)
    o_ref:   (1, r_tile, 1)     per-(split, row-tile) partial sum over its HW range
    acc_ref: (r_tile, 128)      narrow f32 running partial sum (one lane tile wide)
    """
    j = pl.program_id(2)

    @pl.when(j == 0)
    def _():
        acc_ref[...] = jnp.zeros_like(acc_ref)

    # Lane-tile fold: unrolled VPU adds of 128-lane slabs (static, tile-aligned
    # ref slices -> no relayout), then one narrow (r_tile, 128) accumulator
    # read-modify-write per step.  bf16 inputs upcast here, after the DMA.
    partial = x_ref[:, 0:128].astype(jnp.float32)
    for t in range(1, lane_tiles):
        partial = partial + x_ref[:, t * 128:(t + 1) * 128].astype(jnp.float32)
    acc_ref[...] += partial

    @pl.when(j == pl.num_programs(2) - 1)
    def _():
        # Single 128-lane cross-lane (XLU) reduction per (split, row-tile).
        sums = jnp.sum(acc_ref[...], axis=-1, keepdims=True)          # (r_tile, 1)
        o_ref[...] = sums.reshape(o_ref.shape)


# ---------------------------------------------------------------------------
# Kernel 2: squeeze-excite MLP on the pooled (N, C) matrix (tiny).
# ---------------------------------------------------------------------------
def _se_mlp_kernel(p_ref, w1t_ref, b1_ref, w2t_ref, b2_ref, o_ref):
    pooled = p_ref[...]                                                # (N, C) f32
    hidden = jnp.dot(pooled, w1t_ref[...],
                     preferred_element_type=jnp.float32) + b1_ref[...]
    hidden = jnp.maximum(hidden, 0.0)                                  # (N, mid)
    logits = jnp.dot(hidden, w2t_ref[...],
                     preferred_element_type=jnp.float32) + b2_ref[...]
    o_ref[...] = jax.nn.sigmoid(logits).astype(o_ref.dtype)           # (N, C)


def _vmem_budget_and_limit():
    """Generation-aware VMEM budget / scoped limit (bytes)."""
    cap = None
    try:
        info = pltpu.get_tpu_info()
        cap = getattr(info, "vmem_capacity_bytes", None)
    except Exception:
        cap = None
    if not cap or cap <= 0:
        cap = 64 * 1024 * 1024  # conservative fallback (v7x-sized VMEM)
    budget = min(int(cap * 0.62), 96 * 1024 * 1024)   # ~80 MiB on 128 MiB parts, ~40 MiB on v7x
    limit = min(int(cap * 7 // 8), budget + 16 * 1024 * 1024)
    return int(budget), int(limit)


def channel_attention(x, w1, b1, w2, b2, *, max_hw_tile=8192, row_tile_cap=256,
                      vmem_budget_bytes=None):
    """x: (N, C, H, W) NCHW like PyTorch, any float dtype (bf16 stays bf16 on
    the wire; accumulation is f32).
    w1: (mid, C, 1, 1), b1: (mid,)   -- compress conv params
    w2: (C, mid, 1, 1), b2: (C,)     -- excitation conv params
    Returns (N, C, 1, 1) in x.dtype, matching
    torch.sigmoid(excitation(relu(compress(avgpool(x))))).
    """
    N, C, H, W = x.shape
    mid = w1.shape[0]
    HW = H * W
    R = N * C

    x_rows = x.reshape(R, HW)                     # rows dense on sublanes
    itemsize = jnp.dtype(x_rows.dtype).itemsize
    sub = {4: 8, 2: 16, 1: 32}.get(itemsize, 8)   # sublane pack for full vregs

    if vmem_budget_bytes is None:
        budget, vmem_limit = _vmem_budget_and_limit()
    else:
        budget = int(vmem_budget_bytes)
        vmem_limit = budget + 16 * 1024 * 1024

    # ---- tile selection -------------------------------------------------
    nbuf = 2                                       # BlockSpec double-buffering of x
    r_tile = min(_round_up(R, sub), row_tile_cap)
    target_hw = min(int(max_hw_tile), _round_up(HW, 128))
    while True:
        fixed = r_tile * 128 * 4 + 4 * r_tile * 4             # acc scratch + out blocks
        avail = max(budget - fixed, nbuf * r_tile * 128 * itemsize)
        hw_fit = (avail // (nbuf * r_tile * itemsize)) // 128 * 128
        if hw_fit >= min(512, target_hw) or r_tile <= sub:
            break
        r_tile = max(sub, _round_up(r_tile // 2, sub))         # prefer >=512-lane tiles
    hw_tile = int(min(target_hw, max(hw_fit, min(512, target_hw))))
    lane_tiles = hw_tile // 128

    R_pad = _round_up(R, r_tile)
    r_tiles = R_pad // r_tile

    hw_tiles_total = pl.cdiv(HW, hw_tile)
    # Give the second TensorCore (v7x) work when there is a single row tile by
    # splitting the HW streaming axis into two 'parallel' halves emitting
    # independent partial sums.  Harmless on single-core chips.
    n_split = 2 if (r_tiles == 1 and hw_tiles_total >= 2) else 1
    hw_tiles_per_split = pl.cdiv(hw_tiles_total, n_split)
    HW_pad = n_split * hw_tiles_per_split * hw_tile

    if R_pad != R or HW_pad != HW:
        # Zero padding contributes nothing to the sums; padded rows are sliced
        # off below; the mean divides by the *real* H*W.
        x_rows = jnp.pad(x_rows, ((0, R_pad - R), (0, HW_pad - HW)))

    kernel = functools.partial(_global_sum_pool_kernel, lane_tiles=lane_tiles)

    partial_sums = pl.pallas_call(
        kernel,
        out_shape=jax.ShapeDtypeStruct((n_split, R_pad, 1), jnp.float32),
        grid_spec=pltpu.PrefetchScalarGridSpec(
            num_scalar_prefetch=0,
            grid=(n_split, r_tiles, hw_tiles_per_split),
            in_specs=[
                # Each DMA row is a contiguous hw_tile*itemsize-byte HBM run.
                pl.BlockSpec((r_tile, hw_tile),
                             lambda h, i, j: (i, h * hw_tiles_per_split + j)),
            ],
            # Output block constant across the HW (reduction) axis; written
            # only at the last HW step.
            out_specs=pl.BlockSpec((1, r_tile, 1), lambda h, i, j: (h, i, 0)),
            scratch_shapes=[pltpu.VMEM((r_tile, 128), jnp.float32)],
        ),
        compiler_params=pltpu.CompilerParams(
            dimension_semantics=("parallel", "parallel", "arbitrary"),
            vmem_limit_bytes=int(vmem_limit),
        ),
    )(x_rows)

    # Tiny finalize: combine per-split partial sums, divide by the real H*W,
    # reshape rows back to (N, C).
    pooled = (jnp.sum(partial_sums, axis=0)[:R, 0] * (1.0 / HW)).reshape(N, C)

    # Squeeze-excite MLP: full-array blocks, single invocation, f32 math.
    w1t = w1.reshape(mid, C).T.astype(jnp.float32)   # (C, mid)
    b1r = b1.reshape(1, mid).astype(jnp.float32)
    w2t = w2.reshape(C, mid).T.astype(jnp.float32)   # (mid, C)
    b2r = b2.reshape(1, C).astype(jnp.float32)

    gate = pl.pallas_call(
        _se_mlp_kernel,
        out_shape=jax.ShapeDtypeStruct((N, C), x.dtype),
    )(pooled, w1t, b1r, w2t, b2r)

    return gate.reshape(N, C, 1, 1)


def _reference(x, w1, b1, w2, b2):
    """Pure-JAX reference mirroring the PyTorch forward (f32 math)."""
    N, C, H, W = x.shape
    mid = w1.shape[0]
    pooled = jnp.mean(x.astype(jnp.float32), axis=(2, 3))                      # (N, C)
    h = jnp.maximum(pooled @ w1.reshape(mid, C).T.astype(jnp.float32)
                    + b1.astype(jnp.float32), 0.0)                             # (N, mid)
    o = jax.nn.sigmoid(h @ w2.reshape(C, mid).T.astype(jnp.float32)
                       + b2.astype(jnp.float32))                               # (N, C)
    return o.reshape(N, C, 1, 1)


if __name__ == "__main__":
    key = jax.random.PRNGKey(0)
    kx, kw1, kb1, kw2, kb2, kx2, kx3, kw4, kx4, kx5 = jax.random.split(key, 10)

    # --- Module config from the spec: in_channels=4, ratio=2 -> mid=2 ---
    N, C, H, W = 2, 4, 16, 16
    ratio = 2
    mid = C // ratio

    x = jax.random.normal(kx, (N, C, H, W), dtype=jnp.float32)
    w1 = jax.random.normal(kw1, (mid, C, 1, 1), dtype=jnp.float32) * 0.1
    b1 = jax.random.normal(kb1, (mid,), dtype=jnp.float32) * 0.1
    w2 = jax.random.normal(kw2, (C, mid, 1, 1), dtype=jnp.float32) * 0.1
    b2 = jax.random.normal(kb2, (C,), dtype=jnp.float32) * 0.1

    out = channel_attention(x, w1, b1, w2, b2)
    jax.block_until_ready(out)
    ref = _reference(x, w1, b1, w2, b2)
    assert out.shape == (N, C, 1, 1)
    assert jnp.allclose(out.astype(jnp.float32), ref, atol=1e-5, rtol=1e-5), "mismatch (main)"

    # --- Ragged shapes: N*C not a multiple of 8, H*W not a multiple of 128 ---
    x2 = jax.random.normal(kx2, (10, C, 10, 10), dtype=jnp.float32)
    out2 = channel_attention(x2, w1, b1, w2, b2)
    jax.block_until_ready(out2)
    ref2 = _reference(x2, w1, b1, w2, b2)
    assert out2.shape == (10, C, 1, 1)
    assert jnp.allclose(out2.astype(jnp.float32), ref2, atol=1e-5, rtol=1e-5), "mismatch (ragged)"

    # --- Multi HW-tile + split streaming (exercises accumulation + pl.when) ---
    x3 = jax.random.normal(kx3, (1, C, 48, 48), dtype=jnp.float32)
    out3 = channel_attention(x3, w1, b1, w2, b2, max_hw_tile=512)
    jax.block_until_ready(out3)
    ref3 = _reference(x3, w1, b1, w2, b2)
    assert jnp.allclose(out3.astype(jnp.float32), ref3, atol=1e-5, rtol=1e-5), "mismatch (split)"

    # --- Multiple row tiles (N*C larger than the row-tile cap) ---
    C4, mid4 = 96, 48
    w1b = jax.random.normal(kw4, (mid4, C4, 1, 1), dtype=jnp.float32) * 0.05
    b1b = jnp.zeros((mid4,), jnp.float32)
    w2b = jax.random.normal(kw2, (C4, mid4, 1, 1), dtype=jnp.float32) * 0.05
    b2b = jnp.zeros((C4,), jnp.float32)
    x4 = jax.random.normal(kx4, (3, C4, 16, 16), dtype=jnp.float32)
    out4 = channel_attention(x4, w1b, b1b, w2b, b2b, row_tile_cap=128)
    jax.block_until_ready(out4)
    ref4 = _reference(x4, w1b, b1b, w2b, b2b)
    assert jnp.allclose(out4.astype(jnp.float32), ref4, atol=1e-5, rtol=1e-5), "mismatch (rows)"

    # --- bf16 input stays bf16 on the wire; output dtype matches input ---
    x5 = jax.random.normal(kx5, (2, C, 32, 32), dtype=jnp.float32).astype(jnp.bfloat16)
    out5 = channel_attention(x5, w1, b1, w2, b2)
    jax.block_until_ready(out5)
    ref5 = _reference(x5, w1, b1, w2, b2)
    assert out5.dtype == jnp.bfloat16
    assert jnp.allclose(out5.astype(jnp.float32), ref5, atol=1.5e-2, rtol=1.5e-2), "mismatch (bf16)"

    print("KERNEL_OK")
</pallas_src>

<mosaic_0001>
module attributes {stable_mosaic.version = 11 : i64} {
  func.func @_global_sum_pool_kernel(%arg0: i32, %arg1: i32, %arg2: i32, %arg3: memref<8x256xf32, #tpu.memory_space<vmem>>, %arg4: memref<1x8x1xf32, #tpu.memory_space<vmem>>, %arg5: memref<8x128xf32, #tpu.memory_space<vmem>>) attributes {dimension_semantics = [#tpu.dimension_semantics<parallel>, #tpu.dimension_semantics<parallel>, #tpu.dimension_semantics<arbitrary>], iteration_bounds = array<i64: 1, 1, 1>, scalar_prefetch = 0 : i64, scratch_operands = 1 : i64, tpu.core_type = #tpu.core_type<tc>, window_params = [{transform_indices = @transform_0, window_bounds = array<i64: 8, 256>}, {transform_indices = @transform_1, window_bounds = array<i64: 1, 8, 1>}]} {
    %c0_i32 = arith.constant 0 : i32
    %0 = arith.cmpi eq, %arg2, %c0_i32 : i32
    %1 = arith.extui %0 : i1 to i32
    %c0_i32_0 = arith.constant 0 : i32
    %2 = arith.cmpi ne, %1, %c0_i32_0 : i32
    scf.if %2 {
      %cst = arith.constant 0.000000e+00 : f32
      %12 = vector.broadcast %cst : f32 to vector<8x128xf32>
      %c0_9 = arith.constant 0 : index
      %c0_10 = arith.constant 0 : index
      %13 = vector.load %arg5[%c0_9, %c0_10] : memref<8x128xf32, #tpu.memory_space<vmem>>, vector<8x128xf32>
      tpu.vector_store %arg5[%c0_9, %c0_10], %12 {strides = array<i32>} : memref<8x128xf32, #tpu.memory_space<vmem>>, vector<8x128xf32>,
    } else {
    }
    %c0 = arith.constant 0 : index
    %c0_1 = arith.constant 0 : index
    %3 = vector.load %arg3[%c0, %c0_1] : memref<8x256xf32, #tpu.memory_space<vmem>>, vector<8x128xf32>
    %c0_2 = arith.constant 0 : index
    %c128 = arith.constant 128 : index
    %4 = vector.load %arg3[%c0_2, %c128] : memref<8x256xf32, #tpu.memory_space<vmem>>, vector<8x128xf32>
    %5 = arith.addf %3, %4 : vector<8x128xf32>
    %c0_3 = arith.constant 0 : index
    %c0_4 = arith.constant 0 : index
    %6 = vector.load %arg5[%c0_3, %c0_4] : memref<8x128xf32, #tpu.memory_space<vmem>>, vector<8x128xf32>
    %7 = arith.addf %6, %5 : vector<8x128xf32>
    %c0_5 = arith.constant 0 : index
    %c0_6 = arith.constant 0 : index
    %8 = vector.load %arg5[%c0_5, %c0_6] : memref<8x128xf32, #tpu.memory_space<vmem>>, vector<8x128xf32>
    tpu.vector_store %arg5[%c0_5, %c0_6], %7 {strides = array<i32>} : memref<8x128xf32, #tpu.memory_space<vmem>>, vector<8x128xf32>,
    %c0_i32_7 = arith.constant 0 : i32
    %9 = arith.cmpi eq, %arg2, %c0_i32_7 : i32
    %10 = arith.extui %9 : i1 to i32
    %c0_i32_8 = arith.constant 0 : i32
    %11 = arith.cmpi ne, %10, %c0_i32_8 : i32
    scf.if %11 {
      %c0_9 = arith.constant 0 : index
      %c0_10 = arith.constant 0 : index
      %12 = vector.load %arg5[%c0_9, %c0_10] : memref<8x128xf32, #tpu.memory_space<vmem>>, vector<8x128xf32>
      %cst = arith.constant dense<0.000000e+00> : vector<8xf32>
      %13 = vector.multi_reduction <add>, %12, %cst [1] : vector<8x128xf32> to vector<8xf32>
      %14 = vector.shape_cast %13 : vector<8xf32> to vector<8x1xf32>
      %15 = vector.shape_cast %14 : vector<8x1xf32> to vector<1x8x1xf32>
      %c0_11 = arith.constant 0 : index
      %c0_12 = arith.constant 0 : index
      %c0_13 = arith.constant 0 : index
      %16 = vector.load %arg4[%c0_11, %c0_12, %c0_13] : memref<1x8x1xf32, #tpu.memory_space<vmem>>, vector<1x8x1xf32>
      tpu.vector_store %arg4[%c0_11, %c0_12, %c0_13], %15 {strides = array<i32>} : memref<1x8x1xf32, #tpu.memory_space<vmem>>, vector<1x8x1xf32>,
    } else {
    }
    return
  }
  func.func @transform_0(%arg0: i32, %arg1: i32, %arg2: i32) -> (i32, i32) {
    %c1_i32 = arith.constant 1 : i32
    %0 = arith.muli %arg0, %c1_i32 : i32
    %1 = arith.addi %0, %arg2 : i32
    %c0_i32 = arith.constant 0 : i32
    return %arg1, %1 : i32, i32
  }
  func.func @transform_1(%arg0: i32, %arg1: i32, %arg2: i32) -> (i32, i32, i32) {
    %c0_i32 = arith.constant 0 : i32
    %c0_i32_0 = arith.constant 0 : i32
    return %arg0, %arg1, %c0_i32 : i32, i32, i32
  }
}

</mosaic_0001>

<llo_original>
// kernel: tpu_custom_call.1
$region0: #{tpu_custom_call.1}
  #allocation0 [shape = 'u32[]', space=smem, size = 0x4, offset = 0x4, fixed_abs, tag = 'smem constant byte address 0x4 - core index']
  #allocation1 [shape = 'u32[144,128]{1,0:T(1,128)}', space=vmem, size = 0x12000, scoped, tag = 'internal scratch']
  #allocation2 [shape = 'f32[8,128]{1,0:T(8,128)}', space=vmem, size = 0x1000, scoped, tag = 'scratch operand']
  %s0 = inlined_call_operand.hbm [shape: f32[8,256], index: 0, kind: input, shape index: {}]
  %s1 = inlined_call_operand.vmem [shape: f32[1,8,1], index: 1, kind: output, shape index: {}]
  %s2 = sld [smem:[#allocation0]]
  $region26: #{tpu_custom_call.1} parent=0
    _
  %s4 = ssub.s32 1, %s2
  %s5 = scalar_select 0, %s4, %s2
  $region1: #{tpu_custom_call.1} parent=0
    #allocation3 [shape = 'u8[8192]{0}', space=vmem, size = 0x2000, scoped, tag = 'input window, operand 0, single buffered']
    #allocation4 [shape = 's32[1]{0}', space=sflag, size = 0x4, scoped, tag = 'scoped memory for tpu_custom_call.1']
    %6 = vsyncpa [#allocation4], 0
    // Predicated region
    $region2: #{tpu_custom_call.1} parent=1 // pred_check
      _
    $region3: #{tpu_custom_call.1} parent=1 // pred_check_branch
      %8 = sbr.rel (0) target = $region5
    $region4: #{tpu_custom_call.1} parent=1 // pred_region
      %s9 = sadd.s32 0, 0
      %s10 = smul.u32 2, %s9
      %s12 = ssub.s32 256, 256
      %13 = vsyncadd [#allocation4], %s12
      %s14 = smul.addr %s10, 128
      %s15 = scalar_lea.hbm %s0, %s14
      %s17 = sshll.u32 [#allocation3], 4
      %s18 = int_to_ptr.vmem [resolvable:$true] %s17
      %20 = dma.hbm_to_vmem [thread:$0]  %s15, 256, %s18, [#allocation4]
    $region5: #{tpu_custom_call.1} parent=1 // pred_fallthru
      _
    // Predicated region
    $region6: #{tpu_custom_call.1} parent=1 // pred_check
      _
    $region7: #{tpu_custom_call.1} parent=1 // pred_check_branch
      %22 = sbr.rel (0) target = $region9
    $region8: #{tpu_custom_call.1} parent=1 // pred_region
      %23 = dma.done [#allocation4], 256
    $region9: #{tpu_custom_call.1} parent=1 // pred_fallthru
      _
    %s24 = sadd.s32 0, 0
    %s25 = smul.u32 2, %s24
    %p26 = scmp.eq.s32.totalorder 0, 0
    // Predicated region
    $region10: #{tpu_custom_call.1} parent=1 // pred_check
      %p27 = pneg %p26
    $region11: #{tpu_custom_call.1} parent=1 // pred_check_branch
      %29 = sbr.rel (%p27) target = $region13
    $region12: #{tpu_custom_call.1} parent=1 // pred_region
      %30 = vst [vmem:[#allocation2] sm:$0xff] 0.0
    $region13: #{tpu_custom_call.1} parent=1 // pred_fallthru
      _
    %v31 = vld [vmem:[#allocation3] sm:$0xff]
    %v32 = vld [vmem:[#allocation3 + $0x8] sm:$0xff]
    %v33 = vadd.f32 %v31, %v32
    %v34 = vld [vmem:[#allocation2] sm:$0xff]
    %v35 = vadd.f32 %v34, %v33
    %36 = vst [vmem:[#allocation2] sm:$0xff] %v35
    // Predicated region
    $region14: #{tpu_custom_call.1} parent=1 // pred_check
      %p37 = pneg %p26
    $region15: #{tpu_custom_call.1} parent=1 // pred_check_branch
      %39 = sbr.rel (%p37) target = $region17
    $region16: #{tpu_custom_call.1} parent=1 // pred_region
      %v40 = vld [vmem:[#allocation2] sm:$0xff]
      %41 = vadd.xlane.f32.xlu0 %v40
      %v42 = vpop.xlane.xlu0 %41
      %vm43 = vcmask 7168
      %44 = vst.msk [vmem:[%s1] sm:$0xff] %vm43, %v42
    $region17: #{tpu_custom_call.1} parent=1 // pred_fallthru
      _
    // Predicated region
    $region18: #{tpu_custom_call.1} parent=1 // pred_check
      _
    $region19: #{tpu_custom_call.1} parent=1 // pred_check_branch
      %46 = sbr.rel (0) target = $region21
    $region20: #{tpu_custom_call.1} parent=1 // pred_region
      _
    $region21: #{tpu_custom_call.1} parent=1 // pred_fallthru
      _
    // Predicated region
    $region22: #{tpu_custom_call.1} parent=1 // pred_check
      _
    $region23: #{tpu_custom_call.1} parent=1 // pred_check_branch
      %48 = sbr.rel (0) target = $region25
    $region24: #{tpu_custom_call.1} parent=1 // pred_region
      _
    $region25: #{tpu_custom_call.1} parent=1 // pred_fallthru
      _
    %49 = vsyncpa [#allocation4], 1

</llo_original>
